<compile_context>
chip_gen: v5e
topology: v5e:2x2
jax: 0.10.0
libtpu: 0.0.40
codegen_flags: <defaults>
</compile_context>

<pallas_src>
import jax
import jax.numpy as jnp
from jax.experimental import pallas as pl
from jax.experimental.pallas import tpu as pltpu


def _cdiv(a, b):
    return -(-a // b)


def _round_up(a, m):
    return _cdiv(a, m) * m


def _discriminator_kernel(x_ref,
                          w1_ref, b1_ref,
                          w2_ref, b2_ref,
                          w3_ref, b3_ref,
                          out_ref):
    """Fused fc1..fc3 + leaky_relu(0.2). Dropout = identity (eval mode)."""
    def leaky(v):
        # single vmax per vreg instead of compare + select
        return jnp.maximum(v, 0.2 * v)

    cdt = w1_ref.dtype
    # x streams in its native dtype (no separate HBM astype pass in the
    # wrapper); cast to the compute dtype here, hidden under the DMA/MXU
    # pipeline.  No-op when dtypes already match.
    x = x_ref[...].astype(cdt)

    # MXU accumulates in f32; bias add / activation in f32 on the VPU;
    # activations cast back to the compute dtype before the next matmul.
    h1 = leaky(jnp.dot(x, w1_ref[...],
                       preferred_element_type=jnp.float32) + b1_ref[...])
    h2 = leaky(jnp.dot(h1.astype(cdt), w2_ref[...],
                       preferred_element_type=jnp.float32) + b2_ref[...])
    h3 = leaky(jnp.dot(h2.astype(cdt), w3_ref[...],
                       preferred_element_type=jnp.float32) + b3_ref[...])

    out_ref[...] = h3.astype(out_ref.dtype)


def discriminator_forward(x, params, *, block_rows=2048,
                          compute_dtype=jnp.float32):
    """x: any shape reshapeable to (-1, 784). Returns (B, hidden_dim) float32.

    params: (w1, b1, w2, b2, w3, b3[, w4, b4]) with w_i shaped (in, out) and
      b_i shaped (1, out).  fc4 params, if present, are unused (the module
      returns the post-fc3 activations).
    compute_dtype: dtype of the weights / in-kernel matmul operands.  f32 by
      default for parity with the PyTorch module; jnp.bfloat16 recommended on
      v6e/v7x.  The streamed x keeps its own dtype (hand it bf16 upstream to
      halve the dominant HBM stream).
    block_rows: upper bound on batch rows per grid step.  2048 is a good
      default everywhere; keep <= 2048 for an f32 x stream on v7x (64 MiB
      VMEM), 2048-4096 is fine for bf16.
    """
    MIN_ROWS = 16  # bf16 sublane packing; harmless for f32 (needs only 8)

    w1, b1, w2, b2, w3, b3 = params[:6]

    x2d = x.reshape(-1, 28 * 28)            # native dtype; no astype pass
    B, in_features = x2d.shape
    hidden_dim = w3.shape[1]

    # Weights are tiny (~110K params) -> casting them is negligible; biases
    # stay f32 so the pointwise epilogue is pure f32 (cheap on all gens).
    w1c, w2c, w3c = (w.astype(compute_dtype) for w in (w1, w2, w3))
    b1c, b2c, b3c = (b.astype(jnp.float32) for b in (b1, b2, b3))

    # ---- Tile selection -----------------------------------------------------
    # Balanced tiles, even tile count (>=2 when B is big enough) so both v7x
    # TensorCores get work and padding waste is capped at a few sublane groups.
    ntiles = _cdiv(B, block_rows)
    if B >= 2 * MIN_ROWS and ntiles % 2 == 1:
        ntiles += 1
    tb = _round_up(_cdiv(B, ntiles), MIN_ROWS)
    if tb >= B:
        tb = B                              # single whole-array block (exempt)
    grid_n = _cdiv(B, tb)
    b_pad = grid_n * tb

    if b_pad != B:
        # Minimal row padding (< 16 * ntiles rows).  This does cost one extra
        # HBM pass over x; callers with B % 16 == 0 (the usual case) take the
        # zero-copy path above.
        x2d = jnp.pad(x2d, ((0, b_pad - B), (0, 0)))

    # ---- VMEM budget ---------------------------------------------------------
    x_item = jnp.dtype(x2d.dtype).itemsize
    c_item = jnp.dtype(compute_dtype).itemsize
    d1, d2, d3 = w1c.shape[1], w2c.shape[1], w3c.shape[1]
    w_bytes = ((w1c.size + w2c.size + w3c.size) * c_item
               + (b1c.size + b2c.size + b3c.size) * 4)
    live_bytes = tb * (in_features * c_item        # in-kernel cast of x
                       + (d1 + d2 + d3) * 4        # f32 matmul results
                       + (d1 + d2) * c_item)       # re-cast activations
    est = (2 * tb * in_features * x_item           # double-buffered x stream
           + 2 * tb * d3 * 4                       # double-buffered output
           + 2 * w_bytes                           # (conservative) weight bufs
           + live_bytes)
    vmem_limit = min(64 * 1024 * 1024, 2 * est + (8 << 20))

    def const_spec(shape):
        # Same block every grid step -> stays VMEM-resident across the grid.
        return pl.BlockSpec(shape, lambda i: (0,) * len(shape))

    out = pl.pallas_call(
        _discriminator_kernel,
        out_shape=jax.ShapeDtypeStruct((b_pad, hidden_dim), jnp.float32),
        grid=(grid_n,),
        in_specs=[
            pl.BlockSpec((tb, in_features), lambda i: (i, 0)),   # streamed x rows
            const_spec(w1c.shape), const_spec(b1c.shape),
            const_spec(w2c.shape), const_spec(b2c.shape),
            const_spec(w3c.shape), const_spec(b3c.shape),
        ],
        out_specs=pl.BlockSpec((tb, hidden_dim), lambda i: (i, 0)),
        compiler_params=pltpu.CompilerParams(
            dimension_semantics=("parallel",),   # batch tiles shard across TCs (v7x)
            vmem_limit_bytes=int(vmem_limit),
        ),
    )(x2d, w1c, b1c, w2c, b2c, w3c, b3c)

    return out[:B] if b_pad != B else out


def init_params(key, input_size=784, hidden_dim=32, output_size=1):
    """PyTorch-style U(-1/sqrt(fan_in), 1/sqrt(fan_in)) init (incl. unused fc4)."""
    dims = [
        (input_size, hidden_dim * 4),      # fc1
        (hidden_dim * 4, hidden_dim * 2),  # fc2
        (hidden_dim * 2, hidden_dim),      # fc3
        (hidden_dim, output_size),         # fc4 (dead in forward; kept for fidelity)
    ]
    params = []
    for fan_in, fan_out in dims:
        key, kw, kb = jax.random.split(key, 3)
        bound = 1.0 / (fan_in ** 0.5)
        w = jax.random.uniform(kw, (fan_in, fan_out), jnp.float32, -bound, bound)
        b = jax.random.uniform(kb, (1, fan_out), jnp.float32, -bound, bound)
        params += [w, b]
    return tuple(params)


def _reference(x, params, compute_dtype):
    """Pure-JAX reference with identical dtype handling to the kernel."""
    w1, b1, w2, b2, w3, b3 = params[:6]
    lrelu = lambda v: jnp.maximum(v, 0.2 * v)
    xr = x.reshape(-1, 784).astype(compute_dtype)
    w1c, w2c, w3c = (w.astype(compute_dtype) for w in (w1, w2, w3))
    r = lrelu(jnp.dot(xr, w1c, preferred_element_type=jnp.float32)
              + b1.astype(jnp.float32))
    r = lrelu(jnp.dot(r.astype(compute_dtype), w2c,
                      preferred_element_type=jnp.float32)
              + b2.astype(jnp.float32))
    r = lrelu(jnp.dot(r.astype(compute_dtype), w3c,
                      preferred_element_type=jnp.float32)
              + b3.astype(jnp.float32))
    return r


if __name__ == "__main__":
    key = jax.random.PRNGKey(0)
    k_x, k_x2, k_x3, k_p = jax.random.split(key, 4)

    hidden_dim, output_size = 32, 1
    params = init_params(k_p, input_size=28 * 28,
                         hidden_dim=hidden_dim, output_size=output_size)

    # 1) Tiny batch, single whole-array block, f32 bit-tight check.
    B = 2
    x = jax.random.normal(k_x, (B, 1, 28, 28), dtype=jnp.float32)  # NCHW MNIST-style
    out_f32 = jax.block_until_ready(
        discriminator_forward(x, params, compute_dtype=jnp.float32))
    assert out_f32.shape == (B, hidden_dim)
    assert jnp.allclose(out_f32, _reference(x, params, jnp.float32),
                        atol=1e-5, rtol=1e-5)

    # 2) Multi-tile grid (even tile count, no padding), f32 bit-tight check.
    B2 = 64
    x2 = jax.random.normal(k_x2, (B2, 1, 28, 28), dtype=jnp.float32)
    out_mt = jax.block_until_ready(
        discriminator_forward(x2, params, block_rows=16,
                              compute_dtype=jnp.float32))
    assert out_mt.shape == (B2, hidden_dim)
    assert jnp.allclose(out_mt, _reference(x2, params, jnp.float32),
                        atol=1e-5, rtol=1e-5)

    # 3) Misaligned batch (exercises the minimal-pad path), f32 check.
    B3 = 50
    x3 = jax.random.normal(k_x3, (B3, 28 * 28), dtype=jnp.float32)
    out_pad = jax.block_until_ready(
        discriminator_forward(x3, params, block_rows=16,
                              compute_dtype=jnp.float32))
    assert out_pad.shape == (B3, hidden_dim)
    assert jnp.allclose(out_pad, _reference(x3, params, jnp.float32),
                        atol=1e-5, rtol=1e-5)

    # 4) bf16 end-to-end stream (producer hands bf16; recommended on v6e/v7x).
    x_bf16 = x2.astype(jnp.bfloat16)
    out_bf16 = jax.block_until_ready(
        discriminator_forward(x_bf16, params, block_rows=16,
                              compute_dtype=jnp.bfloat16))
    assert out_bf16.shape == (B2, hidden_dim)
    assert jnp.allclose(out_bf16, _reference(x_bf16, params, jnp.bfloat16),
                        atol=2e-2, rtol=2e-2)

    print("KERNEL_OK")
</pallas_src>

<mosaic_0001>
module attributes {stable_mosaic.version = 11 : i64} {
  func.func @_discriminator_kernel(%arg0: i32, %arg1: memref<2x784xf32, #tpu.memory_space<vmem>>, %arg2: memref<784x128xf32, #tpu.memory_space<vmem>>, %arg3: memref<1x128xf32, #tpu.memory_space<vmem>>, %arg4: memref<128x64xf32, #tpu.memory_space<vmem>>, %arg5: memref<1x64xf32, #tpu.memory_space<vmem>>, %arg6: memref<64x32xf32, #tpu.memory_space<vmem>>, %arg7: memref<1x32xf32, #tpu.memory_space<vmem>>, %arg8: memref<2x32xf32, #tpu.memory_space<vmem>>) attributes {dimension_semantics = [#tpu.dimension_semantics<parallel>], iteration_bounds = array<i64: 1>, scalar_prefetch = 0 : i64, scratch_operands = 0 : i64, tpu.core_type = #tpu.core_type<tc>, window_params = [{transform_indices = @transform_0, window_bounds = array<i64: 2, 784>}, {pipeline_mode = #tpu.pipeline_mode<synchronous>, transform_indices = @transform_1, window_bounds = array<i64: 784, 128>}, {pipeline_mode = #tpu.pipeline_mode<synchronous>, transform_indices = @transform_2, window_bounds = array<i64: 1, 128>}, {pipeline_mode = #tpu.pipeline_mode<synchronous>, transform_indices = @transform_3, window_bounds = array<i64: 128, 64>}, {pipeline_mode = #tpu.pipeline_mode<synchronous>, transform_indices = @transform_4, window_bounds = array<i64: 1, 64>}, {pipeline_mode = #tpu.pipeline_mode<synchronous>, transform_indices = @transform_5, window_bounds = array<i64: 64, 32>}, {pipeline_mode = #tpu.pipeline_mode<synchronous>, transform_indices = @transform_6, window_bounds = array<i64: 1, 32>}, {transform_indices = @transform_7, window_bounds = array<i64: 2, 32>}]} {
    %c0 = arith.constant 0 : index
    %c0_0 = arith.constant 0 : index
    %0 = vector.load %arg1[%c0, %c0_0] : memref<2x784xf32, #tpu.memory_space<vmem>>, vector<2x784xf32>
    %c0_1 = arith.constant 0 : index
    %c0_2 = arith.constant 0 : index
    %1 = vector.load %arg2[%c0_1, %c0_2] : memref<784x128xf32, #tpu.memory_space<vmem>>, vector<784x128xf32>
    %cst = arith.constant dense<0.000000e+00> : vector<2x128xf32>
    %2 = tpu.matmul %0, %1, %cst {dimension_numbers = #tpu.dot_dimension_numbers<[1], [0], [0], [1], [0, 0, 1, 1], [], []>} : vector<2x784xf32>, vector<784x128xf32>, vector<2x128xf32> -> vector<2x128xf32>
    %c0_3 = arith.constant 0 : index
    %c0_4 = arith.constant 0 : index
    %3 = vector.load %arg3[%c0_3, %c0_4] : memref<1x128xf32, #tpu.memory_space<vmem>>, vector<1x128xf32>
    %4 = vector.broadcast %3 : vector<1x128xf32> to vector<2x128xf32>
    %5 = arith.addf %2, %4 : vector<2x128xf32>
    %cst_5 = arith.constant 2.000000e-01 : f32
    %6 = vector.broadcast %cst_5 : f32 to vector<2x128xf32>
    %7 = arith.mulf %6, %5 : vector<2x128xf32>
    %8 = arith.maximumf %5, %7 : vector<2x128xf32>
    %c0_6 = arith.constant 0 : index
    %c0_7 = arith.constant 0 : index
    %9 = vector.load %arg4[%c0_6, %c0_7] : memref<128x64xf32, #tpu.memory_space<vmem>>, vector<128x64xf32>
    %cst_8 = arith.constant dense<0.000000e+00> : vector<2x64xf32>
    %10 = tpu.matmul %8, %9, %cst_8 {dimension_numbers = #tpu.dot_dimension_numbers<[1], [0], [0], [1], [0, 0, 1, 1], [], []>} : vector<2x128xf32>, vector<128x64xf32>, vector<2x64xf32> -> vector<2x64xf32>
    %c0_9 = arith.constant 0 : index
    %c0_10 = arith.constant 0 : index
    %11 = vector.load %arg5[%c0_9, %c0_10] : memref<1x64xf32, #tpu.memory_space<vmem>>, vector<1x64xf32>
    %12 = vector.broadcast %11 : vector<1x64xf32> to vector<2x64xf32>
    %13 = arith.addf %10, %12 : vector<2x64xf32>
    %cst_11 = arith.constant 2.000000e-01 : f32
    %14 = vector.broadcast %cst_11 : f32 to vector<2x64xf32>
    %15 = arith.mulf %14, %13 : vector<2x64xf32>
    %16 = arith.maximumf %13, %15 : vector<2x64xf32>
    %c0_12 = arith.constant 0 : index
    %c0_13 = arith.constant 0 : index
    %17 = vector.load %arg6[%c0_12, %c0_13] : memref<64x32xf32, #tpu.memory_space<vmem>>, vector<64x32xf32>
    %cst_14 = arith.constant dense<0.000000e+00> : vector<2x32xf32>
    %18 = tpu.matmul %16, %17, %cst_14 {dimension_numbers = #tpu.dot_dimension_numbers<[1], [0], [0], [1], [0, 0, 1, 1], [], []>} : vector<2x64xf32>, vector<64x32xf32>, vector<2x32xf32> -> vector<2x32xf32>
    %c0_15 = arith.constant 0 : index
    %c0_16 = arith.constant 0 : index
    %19 = vector.load %arg7[%c0_15, %c0_16] : memref<1x32xf32, #tpu.memory_space<vmem>>, vector<1x32xf32>
    %20 = vector.broadcast %19 : vector<1x32xf32> to vector<2x32xf32>
    %21 = arith.addf %18, %20 : vector<2x32xf32>
    %cst_17 = arith.constant 2.000000e-01 : f32
    %22 = vector.broadcast %cst_17 : f32 to vector<2x32xf32>
    %23 = arith.mulf %22, %21 : vector<2x32xf32>
    %24 = arith.maximumf %21, %23 : vector<2x32xf32>
    %c0_18 = arith.constant 0 : index
    %c0_19 = arith.constant 0 : index
    %25 = vector.load %arg8[%c0_18, %c0_19] : memref<2x32xf32, #tpu.memory_space<vmem>>, vector<2x32xf32>
    tpu.vector_store %arg8[%c0_18, %c0_19], %24 {strides = array<i32>} : memref<2x32xf32, #tpu.memory_space<vmem>>, vector<2x32xf32>,
    return
  }
  func.func @transform_0(%arg0: i32) -> (i32, i32) {
    %c0_i32 = arith.constant 0 : i32
    %c0_i32_0 = arith.constant 0 : i32
    return %arg0, %c0_i32 : i32, i32
  }
  func.func @transform_1(%arg0: i32) -> (i32, i32) {
    %c0_i32 = arith.constant 0 : i32
    %c0_i32_0 = arith.constant 0 : i32
    %c0_i32_1 = arith.constant 0 : i32
    return %c0_i32, %c0_i32_0 : i32, i32
  }
  func.func @transform_2(%arg0: i32) -> (i32, i32) {
    %c0_i32 = arith.constant 0 : i32
    %c0_i32_0 = arith.constant 0 : i32
    %c0_i32_1 = arith.constant 0 : i32
    return %c0_i32, %c0_i32_0 : i32, i32
  }
  func.func @transform_3(%arg0: i32) -> (i32, i32) {
    %c0_i32 = arith.constant 0 : i32
    %c0_i32_0 = arith.constant 0 : i32
    %c0_i32_1 = arith.constant 0 : i32
    return %c0_i32, %c0_i32_0 : i32, i32
  }
  func.func @transform_4(%arg0: i32) -> (i32, i32) {
    %c0_i32 = arith.constant 0 : i32
    %c0_i32_0 = arith.constant 0 : i32
    %c0_i32_1 = arith.constant 0 : i32
    return %c0_i32, %c0_i32_0 : i32, i32
  }
  func.func @transform_5(%arg0: i32) -> (i32, i32) {
    %c0_i32 = arith.constant 0 : i32
    %c0_i32_0 = arith.constant 0 : i32
    %c0_i32_1 = arith.constant 0 : i32
    return %c0_i32, %c0_i32_0 : i32, i32
  }
  func.func @transform_6(%arg0: i32) -> (i32, i32) {
    %c0_i32 = arith.constant 0 : i32
    %c0_i32_0 = arith.constant 0 : i32
    %c0_i32_1 = arith.constant 0 : i32
    return %c0_i32, %c0_i32_0 : i32, i32
  }
  func.func @transform_7(%arg0: i32) -> (i32, i32) {
    %c0_i32 = arith.constant 0 : i32
    %c0_i32_0 = arith.constant 0 : i32
    return %arg0, %c0_i32 : i32, i32
  }
}

</mosaic_0001>

<llo_original>
// kernel: tpu_custom_call.1
$region0: #{tpu_custom_call.1}
  #allocation0 [shape = 'u32[]', space=smem, size = 0x4, offset = 0x4, fixed_abs, tag = 'smem constant byte address 0x4 - core index']
  #allocation1 [shape = 'u32[72,128]{1,0:T(1,128)}', space=vmem, size = 0x9000, scoped, tag = 'internal scratch']
  %s0 = inlined_call_operand.vmem [shape: f32[2,784], index: 0, kind: input, shape index: {}]
  %s1 = inlined_call_operand.hbm [shape: f32[784,128], index: 1, kind: input, shape index: {}]
  %s2 = inlined_call_operand.vmem [shape: f32[1,128], index: 2, kind: input, shape index: {}]
  %s3 = inlined_call_operand.vmem [shape: f32[128,64], index: 3, kind: input, shape index: {}]
  %s4 = inlined_call_operand.vmem [shape: f32[1,64], index: 4, kind: input, shape index: {}]
  %s5 = inlined_call_operand.vmem [shape: f32[64,32], index: 5, kind: input, shape index: {}]
  %s6 = inlined_call_operand.vmem [shape: f32[1,32], index: 6, kind: input, shape index: {}]
  %s7 = inlined_call_operand.hbm [shape: f32[2,32], index: 7, kind: output, shape index: {}]
  %s8 = sld [smem:[#allocation0]]
  $region42: #{tpu_custom_call.1} parent=0
    _
  %s10 = ssub.s32 1, %s8
  %s11 = scalar_select 0, %s10, %s8
  $region1: #{tpu_custom_call.1} parent=0
    #allocation2 [shape = 'u8[401408]{0}', space=vmem, size = 0x62000, scoped, tag = 'input window, operand 1, single buffered']
    #allocation3 [shape = 's32[1]{0}', space=sflag, size = 0x4, scoped, tag = 'scoped memory for tpu_custom_call.1']
    #allocation4 [shape = 's32[1]{0}', space=sflag, size = 0x4, scoped, tag = 'scoped memory for tpu_custom_call.1']
    #allocation5 [shape = 'u8[1024]{0}', space=vmem, size = 0x400, scoped, tag = 'output window, operand 0, single buffered']
    %12 = vsyncpa [#allocation3], 0
    %13 = vsyncpa [#allocation4], 0
    // Predicated region
    $region2: #{tpu_custom_call.1} parent=1 // pred_check
      _
    $region3: #{tpu_custom_call.1} parent=1 // pred_check_branch
      %15 = sbr.rel (0) target = $region5
    $region4: #{tpu_custom_call.1} parent=1 // pred_region
      _
    $region5: #{tpu_custom_call.1} parent=1 // pred_fallthru
      _
    // Predicated region
    $region6: #{tpu_custom_call.1} parent=1 // pred_check
      _
    $region7: #{tpu_custom_call.1} parent=1 // pred_check_branch
      %17 = sbr.rel (0) target = $region9
    $region8: #{tpu_custom_call.1} parent=1 // pred_region
      %19 = vsyncadd [#allocation3], 0
      %s20 = sshll.u32 %s1, 4
      %s21 = int_to_ptr.hbm [resolvable:$true] %s20
      %s22 = sshll.u32 [#allocation2], 4
      %s23 = int_to_ptr.vmem [resolvable:$true] %s22
      %28 = dma.hbm_to_vmem [thread:$0]  %s21, 12544, %s23, [#allocation3], 128, 128, 8
    $region9: #{tpu_custom_call.1} parent=1 // pred_fallthru
      _
    // Predicated region
    $region10: #{tpu_custom_call.1} parent=1 // pred_check
      _
    $region11: #{tpu_custom_call.1} parent=1 // pred_check_branch
      %30 = sbr.rel (0) target = $region13
    $region12: #{tpu_custom_call.1} parent=1 // pred_region
      _
    $region13: #{tpu_custom_call.1} parent=1 // pred_fallthru
      _
    // Predicated region
    $region14: #{tpu_custom_call.1} parent=1 // pred_check
      _
    $region15: #{tpu_custom_call.1} parent=1 // pred_check_branch
      %32 = sbr.rel (0) target = $region17
    $region16: #{tpu_custom_call.1} parent=1 // pred_region
      _
    $region17: #{tpu_custom_call.1} parent=1 // pred_fallthru
      _
    // Predicated region
    $region18: #{tpu_custom_call.1} parent=1 // pred_check
      _
    $region19: #{tpu_custom_call.1} parent=1 // pred_check_branch
      %34 = sbr.rel (0) target = $region21
    $region20: #{tpu_custom_call.1} parent=1 // pred_region
      _
    $region21: #{tpu_custom_call.1} parent=1 // pred_fallthru
      _
    // Predicated region
    $region22: #{tpu_custom_call.1} parent=1 // pred_check
      _
    $region23: #{tpu_custom_call.1} parent=1 // pred_check_branch
      %36 = sbr.rel (0) target = $region25
    $region24: #{tpu_custom_call.1} parent=1 // pred_region
      _
    $region25: #{tpu_custom_call.1} parent=1 // pred_fallthru
      _
    // Predicated region
    $region26: #{tpu_custom_call.1} parent=1 // pred_check
      _
    $region27: #{tpu_custom_call.1} parent=1 // pred_check_branch
      %38 = sbr.rel (0) target = $region29
    $region28: #{tpu_custom_call.1} parent=1 // pred_region
      _
    $region29: #{tpu_custom_call.1} parent=1 // pred_fallthru
      _
    // Predicated region
    $region30: #{tpu_custom_call.1} parent=1 // pred_check
      _
    $region31: #{tpu_custom_call.1} parent=1 // pred_check_branch
      %40 = sbr.rel (0) target = $region33
    $region32: #{tpu_custom_call.1} parent=1 // pred_region
      %42 = dma.done [#allocation3], 12544
    $region33: #{tpu_custom_call.1} parent=1 // pred_fallthru
      _
    %v43 = vld [vmem:[%s0] sm:$0xff]
    %v44 = vld [vmem:[%s0 + $0x8] sm:$0x3f]
    %v45 = vld [vmem:[#allocation2] sm:$0xff]
    %v46 = vld [vmem:[#allocation2 + $0x8] sm:$0xff]
    %v47 = vld [vmem:[#allocation2 + $0x10] sm:$0xff]
    %v48 = vld [vmem:[#allocation2 + $0x18] sm:$0xff]
    %v49 = vld [vmem:[#allocation2 + $0x20] sm:$0xff]
    %v50 = vld [vmem:[#allocation2 + $0x28] sm:$0xff]
    %v51 = vld [vmem:[#allocation2 + $0x30] sm:$0xff]
    %v52 = vld [vmem:[#allocation2 + $0x38] sm:$0xff]
    %v53 = vld [vmem:[#allocation2 + $0x40] sm:$0xff]
    %v54 = vld [vmem:[#allocation2 + $0x48] sm:$0xff]
    %v55 = vld [vmem:[#allocation2 + $0x50] sm:$0xff]
    %v56 = vld [vmem:[#allocation2 + $0x58] sm:$0xff]
    %v57 = vld [vmem:[#allocation2 + $0x60] sm:$0xff]
    %v58 = vld [vmem:[#allocation2 + $0x68] sm:$0xff]
    %v59 = vld [vmem:[#allocation2 + $0x70] sm:$0xff]
    %v60 = vld [vmem:[#allocation2 + $0x78] sm:$0xff]
    %v61 = vld [vmem:[#allocation2 + $0x80] sm:$0xff]
    %v62 = vld [vmem:[#allocation2 + $0x88] sm:$0xff]
    %v63 = vld [vmem:[#allocation2 + $0x90] sm:$0xff]
    %v64 = vld [vmem:[#allocation2 + $0x98] sm:$0xff]
    %v65 = vld [vmem:[#allocation2 + $0xa0] sm:$0xff]
    %v66 = vld [vmem:[#allocation2 + $0xa8] sm:$0xff]
    %v67 = vld [vmem:[#allocation2 + $0xb0] sm:$0xff]
    %v68 = vld [vmem:[#allocation2 + $0xb8] sm:$0xff]
    %v69 = vld [vmem:[#allocation2 + $0xc0] sm:$0xff]
    %v70 = vld [vmem:[#allocation2 + $0xc8] sm:$0xff]
    %v71 = vld [vmem:[#allocation2 + $0xd0] sm:$0xff]
    %v72 = vld [vmem:[#allocation2 + $0xd8] sm:$0xff]
    %v73 = vld [vmem:[#allocation2 + $0xe0] sm:$0xff]
    %v74 = vld [vmem:[#allocation2 + $0xe8] sm:$0xff]
    %v75 = vld [vmem:[#allocation2 + $0xf0] sm:$0xff]
    %v76 = vld [vmem:[#allocation2 + $0xf8] sm:$0xff]
    %v77 = vld [vmem:[#allocation2 + $0x100] sm:$0xff]
    %v78 = vld [vmem:[#allocation2 + $0x108] sm:$0xff]
    %v79 = vld [vmem:[#allocation2 + $0x110] sm:$0xff]
    %v80 = vld [vmem:[#allocation2 + $0x118] sm:$0xff]
    %v81 = vld [vmem:[#allocation2 + $0x120] sm:$0xff]
    %v82 = vld [vmem:[#allocation2 + $0x128] sm:$0xff]
    %v83 = vld [vmem:[#allocation2 + $0x130] sm:$0xff]
    %v84 = vld [vmem:[#allocation2 + $0x138] sm:$0xff]
    %v85 = vld [vmem:[#allocation2 + $0x140] sm:$0xff]
    %v86 = vld [vmem:[#allocation2 + $0x148] sm:$0xff]
    %v87 = vld [vmem:[#allocation2 + $0x150] sm:$0xff]
    %v88 = vld [vmem:[#allocation2 + $0x158] sm:$0xff]
    %v89 = vld [vmem:[#allocation2 + $0x160] sm:$0xff]
    %v90 = vld [vmem:[#allocation2 + $0x168] sm:$0xff]
    %v91 = vld [vmem:[#allocation2 + $0x170] sm:$0xff]
    %v92 = vld [vmem:[#allocation2 + $0x178] sm:$0xff]
    %v93 = vld [vmem:[#allocation2 + $0x180] sm:$0xff]
    %v94 = vld [vmem:[#allocation2 + $0x188] sm:$0xff]
    %v95 = vld [vmem:[#allocation2 + $0x190] sm:$0xff]
    %v96 = vld [vmem:[#allocation2 + $0x198] sm:$0xff]
    %v97 = vld [vmem:[#allocation2 + $0x1a0] sm:$0xff]
    %v98 = vld [vmem:[#allocation2 + $0x1a8] sm:$0xff]
    %v99 = vld [vmem:[#allocation2 + $0x1b0] sm:$0xff]
    %v100 = vld [vmem:[#allocation2 + $0x1b8] sm:$0xff]
    %v101 = vld [vmem:[#allocation2 + $0x1c0] sm:$0xff]
    %v102 = vld [vmem:[#allocation2 + $0x1c8] sm:$0xff]
    %v103 = vld [vmem:[#allocation2 + $0x1d0] sm:$0xff]
    %v104 = vld [vmem:[#allocation2 + $0x1d8] sm:$0xff]
    %v105 = vld [vmem:[#allocation2 + $0x1e0] sm:$0xff]
    %v106 = vld [vmem:[#allocation2 + $0x1e8] sm:$0xff]
    %v107 = vld [vmem:[#allocation2 + $0x1f0] sm:$0xff]
    %v108 = vld [vmem:[#allocation2 + $0x1f8] sm:$0xff]
    %v109 = vld [vmem:[#allocation2 + $0x200] sm:$0xff]
    %v110 = vld [vmem:[#allocation2 + $0x208] sm:$0xff]
    %v111 = vld [vmem:[#allocation2 + $0x210] sm:$0xff]
    %v112 = vld [vmem:[#allocation2 + $0x218] sm:$0xff]
    %v113 = vld [vmem:[#allocation2 + $0x220] sm:$0xff]
    %v114 = vld [vmem:[#allocation2 + $0x228] sm:$0xff]
    %v115 = vld [vmem:[#allocation2 + $0x230] sm:$0xff]
    %v116 = vld [vmem:[#allocation2 + $0x238] sm:$0xff]
    %v117 = vld [vmem:[#allocation2 + $0x240] sm:$0xff]
    %v118 = vld [vmem:[#allocation2 + $0x248] sm:$0xff]
    %v119 = vld [vmem:[#allocation2 + $0x250] sm:$0xff]
    %v120 = vld [vmem:[#allocation2 + $0x258] sm:$0xff]
    %v121 = vld [vmem:[#allocation2 + $0x260] sm:$0xff]
    %v122 = vld [vmem:[#allocation2 + $0x268] sm:$0xff]
    %v123 = vld [vmem:[#allocation2 + $0x270] sm:$0xff]
    %v124 = vld [vmem:[#allocation2 + $0x278] sm:$0xff]
    %v125 = vld [vmem:[#allocation2 + $0x280] sm:$0xff]
    %v126 = vld [vmem:[#allocation2 + $0x288] sm:$0xff]
    %v127 = vld [vmem:[#allocation2 + $0x290] sm:$0xff]
    %v128 = vld [vmem:[#allocation2 + $0x298] sm:$0xff]
    %v129 = vld [vmem:[#allocation2 + $0x2a0] sm:$0xff]
    %v130 = vld [vmem:[#allocation2 + $0x2a8] sm:$0xff]
    %v131 = vld [vmem:[#allocation2 + $0x2b0] sm:$0xff]
    %v132 = vld [vmem:[#allocation2 + $0x2b8] sm:$0xff]
    %v133 = vld [vmem:[#allocation2 + $0x2c0] sm:$0xff]
    %v134 = vld [vmem:[#allocation2 + $0x2c8] sm:$0xff]
    %v135 = vld [vmem:[#allocation2 + $0x2d0] sm:$0xff]
    %v136 = vld [vmem:[#allocation2 + $0x2d8] sm:$0xff]
    %v137 = vld [vmem:[#allocation2 + $0x2e0] sm:$0xff]
    %v138 = vld [vmem:[#allocation2 + $0x2e8] sm:$0xff]
    %v139 = vld [vmem:[#allocation2 + $0x2f0] sm:$0xff]
    %v140 = vld [vmem:[#allocation2 + $0x2f8] sm:$0xff]
    %v141 = vld [vmem:[#allocation2 + $0x300] sm:$0xff]
    %v142 = vld [vmem:[#allocation2 + $0x308] sm:$0xff]
    %v143 = vld [vmem:[%s2] sm:$0x1]
    %v145 = vperm.slane %v143, 0
    %149 = vst [vmem:[#allocation1] ss:$4 sm:$0xff] %v43
    %s150 = scalar_lea.vmem [#allocation1], 32
    %151 = vst [vmem:[%s150] ss:$4 sm:$0xff] %v44
    %v152 = vld.sshfl [vmem:[#allocation1] sm:$0xff pattern:$0x73625140]
    %v153 = vld.sshfl [vmem:[#allocation1 + $0x8] sm:$0xff pattern:$0x73625140]
    %v154 = vld.sshfl [vmem:[#allocation1 + $0x10] sm:$0xff pattern:$0x73625140]
    %v155 = vld.sshfl [vmem:[#allocation1 + $0x18] sm:$0xff pattern:$0x73625140]
    %v156 = vld.sshfl [vmem:[#allocation1 + $0x20] sm:$0xff pattern:$0x73625140]
    %v157 = vld.sshfl [vmem:[#allocation1 + $0x28] sm:$0xff pattern:$0x73625140]
    %v158 = vld.sshfl [vmem:[#allocation1 + $0x30] sm:$0xff pattern:$0x73625140]
    %vm165 = vcmask 130048
    %v166 = vsel %vm165, %v158, 0
    %168 = vmatpush.msra.mxu0 %v60
    %169 = vmatpush.msra.mxu0 %v59
    %170 = vmatpush.msra.mxu0 %v58
    %171 = vmatpush.msra.mxu0 %v57
    %172 = vmatpush.msra.mxu0 %v56
    %173 = vmatpush.msra.mxu0 %v55
    %174 = vmatpush.msra.mxu0 %v54
    %175 = vmatpush.msra.mxu0 %v53
    %176 = vmatpush.msra.mxu0 %v52
    %177 = vmatpush.msra.mxu0 %v51
    %178 = vmatpush.msra.mxu0 %v50
    %179 = vmatpush.msra.mxu0 %v49
    %180 = vmatpush.msra.mxu0 %v48
    %181 = vmatpush.msra.mxu0 %v47
    %182 = vmatpush.msra.mxu0 %v46
    %183 = vmatpush.msra.mxu0 %v45
    %184 = vmatmul.f32.gmra.mxu0 %v152
    %v185 = vpop.f32.mrf.mxu0
    %v186 = vadd.f32 %v145, %v185
    %187 = vdwg.mxu0
    %188 = vmatpush.msra.mxu0 %v76
    %189 = vmatpush.msra.mxu0 %v75
    %190 = vmatpush.msra.mxu0 %v74
    %191 = vmatpush.msra.mxu0 %v73
    %192 = vmatpush.msra.mxu0 %v72
    %193 = vmatpush.msra.mxu0 %v71
    %194 = vmatpush.msra.mxu0 %v70
    %195 = vmatpush.msra.mxu0 %v69
    %196 = vmatpush.msra.mxu0 %v68
    %197 = vmatpush.msra.mxu0 %v67
    %198 = vmatpush.msra.mxu0 %v66
    %199 = vmatpush.msra.mxu0 %v65
    %200 = vmatpush.msra.mxu0 %v64
    %201 = vmatpush.msra.mxu0 %v63
    %202 = vmatpush.msra.mxu0 %v62
    %203 = vmatpush.msra.mxu0 %v61
    %204 = vmatmul.f32.gmra.mxu0 %v153
    %v205 = vpop.f32.mrf.mxu0
    %v206 = vadd.f32 %v186, %v205
    %207 = vdwg.mxu0
    %208 = vmatpush.msra.mxu0 %v92
    %209 = vmatpush.msra.mxu0 %v91
    %210 = vmatpush.msra.mxu0 %v90
    %211 = vmatpush.msra.mxu0 %v89
    %212 = vmatpush.msra.mxu0 %v88
    %213 = vmatpush.msra.mxu0 %v87
    %214 = vmatpush.msra.mxu0 %v86
    %215 = vmatpush.msra.mxu0 %v85
    %216 = vmatpush.msra.mxu0 %v84
    %217 = vmatpush.msra.mxu0 %v83
    %218 = vmatpush.msra.mxu0 %v82
    %219 = vmatpush.msra.mxu0 %v81
    %220 = vmatpush.msra.mxu0 %v80
    %221 = vmatpush.msra.mxu0 %v79
    %222 = vmatpush.msra.mxu0 %v78
    %223 = vmatpush.msra.mxu0 %v77
    %224 = vmatmul.f32.gmra.mxu0 %v154
    %v225 = vpop.f32.mrf.mxu0
    %v226 = vadd.f32 %v206, %v225
    %227 = vdwg.mxu0
    %228 = vmatpush.msra.mxu0 %v108
    %229 = vmatpush.msra.mxu0 %v107
    %230 = vmatpush.msra.mxu0 %v106
    %231 = vmatpush.msra.mxu0 %v105
    %232 = vmatpush.msra.mxu0 %v104
    %233 = vmatpush.msra.mxu0 %v103
    %234 = vmatpush.msra.mxu0 %v102
    %235 = vmatpush.msra.mxu0 %v101
    %236 = vmatpush.msra.mxu0 %v100
    %237 = vmatpush.msra.mxu0 %v99
    %238 = vmatpush.msra.mxu0 %v98
    %239 = vmatpush.msra.mxu0 %v97
    %240 = vmatpush.msra.mxu0 %v96
    %241 = vmatpush.msra.mxu0 %v95
    %242 = vmatpush.msra.mxu0 %v94
    %243 = vmatpush.msra.mxu0 %v93
    %244 = vmatmul.f32.gmra.mxu0 %v155
    %v245 = vpop.f32.mrf.mxu0
    %v246 = vadd.f32 %v226, %v245
    %247 = vdwg.mxu0
    %248 = vmatpush.msra.mxu0 %v124
    %249 = vmatpush.msra.mxu0 %v123
    %250 = vmatpush.msra.mxu0 %v122
    %251 = vmatpush.msra.mxu0 %v121
    %252 = vmatpush.msra.mxu0 %v120
    %253 = vmatpush.msra.mxu0 %v119
    %254 = vmatpush.msra.mxu0 %v118
    %255 = vmatpush.msra.mxu0 %v117
    %256 = vmatpush.msra.mxu0 %v116
    %257 = vmatpush.msra.mxu0 %v115
    %258 = vmatpush.msra.mxu0 %v114
    %259 = vmatpush.msra.mxu0 %v113
    %260 = vmatpush.msra.mxu0 %v112
    %261 = vmatpush.msra.mxu0 %v111
    %262 = vmatpush.msra.mxu0 %v110
    %263 = vmatpush.msra.mxu0 %v109
    %264 = vmatmul.f32.gmra.mxu0 %v156
    %v265 = vpop.f32.mrf.mxu0
    %v266 = vadd.f32 %v246, %v265
    %267 = vdwg.mxu0
    %268 = vmatpush.msra.mxu0 %v140
    %269 = vmatpush.msra.mxu0 %v139
    %270 = vmatpush.msra.mxu0 %v138
    %271 = vmatpush.msra.mxu0 %v137
    %272 = vmatpush.msra.mxu0 %v136
    %273 = vmatpush.msra.mxu0 %v135
    %274 = vmatpush.msra.mxu0 %v134
    %275 = vmatpush.msra.mxu0 %v133
    %276 = vmatpush.msra.mxu0 %v132
    %277 = vmatpush.msra.mxu0 %v131
    %278 = vmatpush.msra.mxu0 %v130
    %279 = vmatpush.msra.mxu0 %v129
    %280 = vmatpush.msra.mxu0 %v128
    %281 = vmatpush.msra.mxu0 %v127
    %282 = vmatpush.msra.mxu0 %v126
    %283 = vmatpush.msra.mxu0 %v125
    %284 = vmatmul.f32.gmra.mxu0 %v157
    %v285 = vpop.f32.mrf.mxu0
    %v286 = vadd.f32 %v266, %v285
    %287 = vdwg.mxu0
    %288 = vmatpush.msra.mxu0 0.0
    %289 = vmatpush.msra.mxu0 0.0
    %290 = vmatpush.msra.mxu0 0.0
    %291 = vmatpush.msra.mxu0 0.0
    %292 = vmatpush.msra.mxu0 0.0
    %293 = vmatpush.msra.mxu0 0.0
    %294 = vmatpush.msra.mxu0 0.0
    %295 = vmatpush.msra.mxu0 0.0
    %296 = vmatpush.msra.mxu0 0.0
    %297 = vmatpush.msra.mxu0 0.0
    %298 = vmatpush.msra.mxu0 0.0
    %299 = vmatpush.msra.mxu0 0.0
    %300 = vmatpush.msra.mxu0 0.0
    %301 = vmatpush.msra.mxu0 0.0
    %302 = vmatpush.msra.mxu0 %v142
    %303 = vmatpush.msra.mxu0 %v141
    %304 = vmatmul.f32.gmra.mxu0 %v166
    %v305 = vpop.f32.mrf.mxu0
    %v306 = vadd.f32 %v286, %v305
    %307 = vdwg.mxu0
    %v308 = vmul.f32 %v306, 0.2
    %v309 = vmax.f32 %v306, %v308
    %v310 = vld [vmem:[%s3] sm:$0xff]
    %v311 = vld [vmem:[%s3 + $0x8] sm:$0xff]
    %v312 = vld [vmem:[%s3 + $0x10] sm:$0xff]
    %v313 = vld [vmem:[%s3 + $0x18] sm:$0xff]
    %v314 = vld [vmem:[%s3 + $0x20] sm:$0xff]
    %v315 = vld [vmem:[%s3 + $0x28] sm:$0xff]
    %v316 = vld [vmem:[%s3 + $0x30] sm:$0xff]
    %v317 = vld [vmem:[%s3 + $0x38] sm:$0xff]
    %v318 = vld [vmem:[%s3 + $0x40] sm:$0xff]
    %v319 = vld [vmem:[%s3 + $0x48] sm:$0xff]
    %v320 = vld [vmem:[%s3 + $0x50] sm:$0xff]
    %v321 = vld [vmem:[%s3 + $0x58] sm:$0xff]
    %v322 = vld [vmem:[%s3 + $0x60] sm:$0xff]
    %v323 = vld [vmem:[%s3 + $0x68] sm:$0xff]
    %v324 = vld [vmem:[%s3 + $0x70] sm:$0xff]
    %v325 = vld [vmem:[%s3 + $0x78] sm:$0xff]
    %v326 = vld [vmem:[%s4] sm:$0x1]
    %v328 = vperm.slane %v326, 0
    %330 = vmatpush.msra.mxu0 %v325
    %331 = vmatpush.msra.mxu0 %v324
    %332 = vmatpush.msra.mxu0 %v323
    %333 = vmatpush.msra.mxu0 %v322
    %334 = vmatpush.msra.mxu0 %v321
    %335 = vmatpush.msra.mxu0 %v320
    %336 = vmatpush.msra.mxu0 %v319
    %337 = vmatpush.msra.mxu0 %v318
    %338 = vmatpush.msra.mxu0 %v317
    %339 = vmatpush.msra.mxu0 %v316
    %340 = vmatpush.msra.mxu0 %v315
    %341 = vmatpush.msra.mxu0 %v314
    %342 = vmatpush.msra.mxu0 %v313
    %343 = vmatpush.msra.mxu0 %v312
    %344 = vmatpush.msra.mxu0 %v311
    %345 = vmatpush.msra.mxu0 %v310
    %346 = vmatmul.f32.gmra.mxu0 %v309
    %v347 = vpop.f32.mrf.mxu0
    %v348 = vadd.f32 %v328, %v347
    %349 = vdwg.mxu0
    %v350 = vmul.f32 %v348, 0.2
    %v351 = vmax.f32 %v348, %v350
    %v352 = vld [vmem:[%s5] sm:$0xff]
    %v353 = vld [vmem:[%s5 + $0x8] sm:$0xff]
    %v354 = vld [vmem:[%s5 + $0x10] sm:$0xff]
    %v355 = vld [vmem:[%s5 + $0x18] sm:$0xff]
    %v356 = vld [vmem:[%s5 + $0x20] sm:$0xff]
    %v357 = vld [vmem:[%s5 + $0x28] sm:$0xff]
    %v358 = vld [vmem:[%s5 + $0x30] sm:$0xff]
    %v359 = vld [vmem:[%s5 + $0x38] sm:$0xff]
    %v360 = vld [vmem:[%s6] sm:$0x1]
    %v362 = vperm.slane %v360, 0
    %vm364 = vcmask 523264
    %v366 = vsel %vm364, %v351, 0
    %368 = vmatpush.msra.mxu0 0.0
    %369 = vmatpush.msra.mxu0 0.0
    %370 = vmatpush.msra.mxu0 0.0
    %371 = vmatpush.msra.mxu0 0.0
    %372 = vmatpush.msra.mxu0 0.0
    %373 = vmatpush.msra.mxu0 0.0
    %374 = vmatpush.msra.mxu0 0.0
    %375 = vmatpush.msra.mxu0 0.0
    %376 = vmatpush.msra.mxu0 %v359
    %377 = vmatpush.msra.mxu0 %v358
    %378 = vmatpush.msra.mxu0 %v357
    %379 = vmatpush.msra.mxu0 %v356
    %380 = vmatpush.msra.mxu0 %v355
    %381 = vmatpush.msra.mxu0 %v354
    %382 = vmatpush.msra.mxu0 %v353
    %383 = vmatpush.msra.mxu0 %v352
    %384 = vmatmul.f32.gmra.mxu0 %v366
    %v385 = vpop.f32.mrf.mxu0
    %v386 = vadd.f32 %v362, %v385
    %387 = vdwg.mxu0
    %v388 = vmul.f32 %v386, 0.2
    %v389 = vmax.f32 %v386, %v388
    %vm390 = vcmask 254976
    %391 = vst.msk [vmem:[#allocation5] sm:$0x3] %vm390, %v389
    // Predicated region
    $region34: #{tpu_custom_call.1} parent=1 // pred_check
      _
    $region35: #{tpu_custom_call.1} parent=1 // pred_check_branch
      %393 = sbr.rel (0) target = $region37
    $region36: #{tpu_custom_call.1} parent=1 // pred_region
      %395 = vsyncadd [#allocation4], 0
      %s397 = sshll.u32 [#allocation5], 4
      %s398 = int_to_ptr.vmem [resolvable:$true] %s397
      %s399 = sshll.u32 %s7, 4
      %s400 = int_to_ptr.hbm [resolvable:$true] %s399
      %402 = dma.vmem_to_hbm [thread:$0]  %s398, 32, %s400, [#allocation4]
    $region37: #{tpu_custom_call.1} parent=1 // pred_fallthru
      _
    // Predicated region
    $region38: #{tpu_custom_call.1} parent=1 // pred_check
      _
    $region39: #{tpu_custom_call.1} parent=1 // pred_check_branch
      %404 = sbr.rel (0) target = $region41
    $region40: #{tpu_custom_call.1} parent=1 // pred_region
      %406 = dma.done [#allocation4], 32
    $region41: #{tpu_custom_call.1} parent=1 // pred_fallthru
      _
    %407 = vsyncpa [#allocation3], 1
    %408 = vsyncpa [#allocation4], 1

</llo_original>
